<compile_context>
chip_gen: v7x
topology: tpu7x:2x2x1
jax: 0.10.0
libtpu: 0.0.40
codegen_flags: <defaults>
</compile_context>

<pallas_src>
import jax
import jax.numpy as jnp
from jax.experimental import pallas as pl
from jax.experimental.pallas import tpu as pltpu


def _tv_kernel(x_ref, h_ref, w_ref):
    """Accumulate squared H/W differences of a (TB, H, W) block.

    h_ref: (1, 1, W)   per-lane partial sums of vertical diffs (resident).
    w_ref: (1, 1, W-1) per-lane partial sums of horizontal diffs (resident).
    """
    j = pl.program_id(1)  # reduction axis (inner, "arbitrary")

    @pl.when(j == 0)
    def _():
        h_ref[...] = jnp.zeros_like(h_ref)
        w_ref[...] = jnp.zeros_like(w_ref)

    x = x_ref[...].astype(jnp.float32)            # (TB, H, W)
    dh = x[:, 1:, :] - x[:, :-1, :]               # (TB, H-1, W)
    dw = x[:, :, 1:] - x[:, :, :-1]               # (TB, H, W-1)

    # Per-lane partial sums (cheap VPU adds into resident VMEM tiles); the
    # final cross-lane reduce happens once, outside the kernel.
    ph = jnp.sum(dh * dh, axis=0)                 # (H-1, W)
    ph = jnp.sum(ph, axis=0, keepdims=True)       # (1, W)
    pw = jnp.sum(dw * dw, axis=0)                 # (H, W-1)
    pw = jnp.sum(pw, axis=0, keepdims=True)       # (1, W-1)

    h_ref[...] += ph[None, :, :]
    w_ref[...] += pw[None, :, :]


def tv_loss(x, tv_loss_weight=1.0):
    """Total-variation loss matching the PyTorch TVLoss.forward semantics."""
    B, C, H, W = x.shape
    BC = B * C
    itemsize = jnp.dtype(x.dtype).itemsize

    # ---- tiling -----------------------------------------------------------
    # Two independent accumulation streams: on v7x the "parallel" axis is
    # sharded across the two TensorCores; on v5e/v6e it is a cheap serial
    # split of the same loop.
    NSPLIT = 2
    per_split = -(-BC // NSPLIT)

    # As many full planes per grid step as fit a ~2 MiB f32 budget
    # (amortizes the ~0.35 us per-step overhead, stays within scoped VMEM
    # even with double buffering + slice temporaries on v7x's smaller VMEM).
    plane_f32_bytes = H * W * 4
    tb_budget = max(1, (2 * 1024 * 1024) // plane_f32_bytes)
    TB = max(1, min(tb_budget, per_split))
    NBLK = -(-per_split // TB)
    BC_pad = NSPLIT * NBLK * TB

    x_flat = x.reshape(BC, H, W)                  # native dtype, no upcast
    if BC_pad != BC:
        # Zero-padded planes contribute exactly 0 to both sums.
        x_flat = jnp.pad(x_flat, ((0, BC_pad - BC), (0, 0), (0, 0)))

    numel = B * C * H * W
    cost = pl.CostEstimate(
        flops=6 * numel,
        transcendentals=0,
        bytes_accessed=numel * itemsize + NSPLIT * (2 * W - 1) * 4,
    )

    h_out, w_out = pl.pallas_call(
        _tv_kernel,
        out_shape=(
            jax.ShapeDtypeStruct((NSPLIT, 1, W), jnp.float32),
            jax.ShapeDtypeStruct((NSPLIT, 1, W - 1), jnp.float32),
        ),
        grid_spec=pltpu.PrefetchScalarGridSpec(
            num_scalar_prefetch=0,
            grid=(NSPLIT, NBLK),
            in_specs=[
                pl.BlockSpec((TB, H, W), lambda c, j: (c * NBLK + j, 0, 0)),
            ],
            out_specs=[
                pl.BlockSpec((1, 1, W), lambda c, j: (c, 0, 0)),
                pl.BlockSpec((1, 1, W - 1), lambda c, j: (c, 0, 0)),
            ],
        ),
        compiler_params=pltpu.CompilerParams(
            dimension_semantics=("parallel", "arbitrary"),
            vmem_limit_bytes=32 * 1024 * 1024,
        ),
        cost_estimate=cost,
    )(x_flat)

    h_tv = jnp.sum(h_out)
    w_tv = jnp.sum(w_out)

    count_h = C * (H - 1) * W                     # tensor_size(x[:, :, 1:, :])
    count_w = C * H * (W - 1)                     # tensor_size(x[:, :, :, 1:])

    return tv_loss_weight * 2.0 * (h_tv / count_h + w_tv / count_w) / B


def _tv_loss_ref(x, tv_loss_weight=1.0):
    B, C, H, W = x.shape
    count_h = C * (H - 1) * W
    count_w = C * H * (W - 1)
    h_tv = jnp.sum((x[:, :, 1:, :] - x[:, :, :-1, :]) ** 2)
    w_tv = jnp.sum((x[:, :, :, 1:] - x[:, :, :, :-1]) ** 2)
    return tv_loss_weight * 2.0 * (h_tv / count_h + w_tv / count_w) / B


if __name__ == "__main__":
    key = jax.random.PRNGKey(0)
    x = jax.random.normal(key, (2, 4, 16, 16), dtype=jnp.float32)

    out = jax.block_until_ready(tv_loss(x, tv_loss_weight=1.0))
    ref = jax.block_until_ready(_tv_loss_ref(x, tv_loss_weight=1.0))

    assert jnp.allclose(out, ref, rtol=1e-5, atol=1e-5), (out, ref)
    print("KERNEL_OK")
</pallas_src>

<mosaic_0001>
module attributes {stable_mosaic.version = 11 : i64} {
  func.func @_tv_kernel(%arg0: i32, %arg1: i32, %arg2: memref<4x16x16xf32, #tpu.memory_space<vmem>>, %arg3: memref<1x1x16xf32, #tpu.memory_space<vmem>>, %arg4: memref<1x1x15xf32, #tpu.memory_space<vmem>>) attributes {dimension_semantics = [#tpu.dimension_semantics<parallel>, #tpu.dimension_semantics<arbitrary>], iteration_bounds = array<i64: 2, 1>, scalar_prefetch = 0 : i64, scratch_operands = 0 : i64, tpu.core_type = #tpu.core_type<tc>, window_params = [{transform_indices = @transform_0, window_bounds = array<i64: 4, 16, 16>}, {transform_indices = @transform_1, window_bounds = array<i64: 1, 1, 16>}, {transform_indices = @transform_2, window_bounds = array<i64: 1, 1, 15>}]} {
    %c0_i32 = arith.constant 0 : i32
    %0 = arith.cmpi eq, %arg1, %c0_i32 : i32
    %1 = arith.extui %0 : i1 to i32
    %c0_i32_0 = arith.constant 0 : i32
    %2 = arith.cmpi ne, %1, %c0_i32_0 : i32
    scf.if %2 {
      %cst_18 = arith.constant 0.000000e+00 : f32
      %26 = vector.broadcast %cst_18 : f32 to vector<1x1x16xf32>
      %c0_19 = arith.constant 0 : index
      %c0_20 = arith.constant 0 : index
      %c0_21 = arith.constant 0 : index
      %27 = vector.load %arg3[%c0_19, %c0_20, %c0_21] : memref<1x1x16xf32, #tpu.memory_space<vmem>>, vector<1x1x16xf32>
      tpu.vector_store %arg3[%c0_19, %c0_20, %c0_21], %26 {strides = array<i32>} : memref<1x1x16xf32, #tpu.memory_space<vmem>>, vector<1x1x16xf32>,
      %cst_22 = arith.constant 0.000000e+00 : f32
      %28 = vector.broadcast %cst_22 : f32 to vector<1x1x15xf32>
      %c0_23 = arith.constant 0 : index
      %c0_24 = arith.constant 0 : index
      %c0_25 = arith.constant 0 : index
      %29 = vector.load %arg4[%c0_23, %c0_24, %c0_25] : memref<1x1x15xf32, #tpu.memory_space<vmem>>, vector<1x1x15xf32>
      tpu.vector_store %arg4[%c0_23, %c0_24, %c0_25], %28 {strides = array<i32>} : memref<1x1x15xf32, #tpu.memory_space<vmem>>, vector<1x1x15xf32>,
    } else {
    }
    %c0 = arith.constant 0 : index
    %c0_1 = arith.constant 0 : index
    %c0_2 = arith.constant 0 : index
    %3 = vector.load %arg2[%c0, %c0_1, %c0_2] : memref<4x16x16xf32, #tpu.memory_space<vmem>>, vector<4x16x16xf32>
    %4 = vector.extract_strided_slice %3 {offsets = [0, 1, 0], sizes = [4, 15, 16], strides = [1, 1, 1]} : vector<4x16x16xf32> to vector<4x15x16xf32>
    %5 = vector.extract_strided_slice %3 {offsets = [0, 0, 0], sizes = [4, 15, 16], strides = [1, 1, 1]} : vector<4x16x16xf32> to vector<4x15x16xf32>
    %6 = arith.subf %4, %5 : vector<4x15x16xf32>
    %7 = vector.extract_strided_slice %3 {offsets = [0, 0, 1], sizes = [4, 16, 15], strides = [1, 1, 1]} : vector<4x16x16xf32> to vector<4x16x15xf32>
    %8 = vector.extract_strided_slice %3 {offsets = [0, 0, 0], sizes = [4, 16, 15], strides = [1, 1, 1]} : vector<4x16x16xf32> to vector<4x16x15xf32>
    %9 = arith.subf %7, %8 : vector<4x16x15xf32>
    %10 = arith.mulf %6, %6 : vector<4x15x16xf32>
    %cst = arith.constant dense<0.000000e+00> : vector<15x16xf32>
    %11 = vector.multi_reduction <add>, %10, %cst [0] : vector<4x15x16xf32> to vector<15x16xf32>
    %cst_3 = arith.constant dense<0.000000e+00> : vector<16xf32>
    %12 = vector.multi_reduction <add>, %11, %cst_3 [0] : vector<15x16xf32> to vector<16xf32>
    %13 = vector.shape_cast %12 : vector<16xf32> to vector<1x16xf32>
    %14 = arith.mulf %9, %9 : vector<4x16x15xf32>
    %cst_4 = arith.constant dense<0.000000e+00> : vector<16x15xf32>
    %15 = vector.multi_reduction <add>, %14, %cst_4 [0] : vector<4x16x15xf32> to vector<16x15xf32>
    %cst_5 = arith.constant dense<0.000000e+00> : vector<15xf32>
    %16 = vector.multi_reduction <add>, %15, %cst_5 [0] : vector<16x15xf32> to vector<15xf32>
    %17 = vector.shape_cast %16 : vector<15xf32> to vector<1x15xf32>
    %c0_6 = arith.constant 0 : index
    %c0_7 = arith.constant 0 : index
    %c0_8 = arith.constant 0 : index
    %18 = vector.load %arg3[%c0_6, %c0_7, %c0_8] : memref<1x1x16xf32, #tpu.memory_space<vmem>>, vector<1x1x16xf32>
    %19 = vector.shape_cast %13 : vector<1x16xf32> to vector<1x1x16xf32>
    %20 = arith.addf %18, %19 : vector<1x1x16xf32>
    %c0_9 = arith.constant 0 : index
    %c0_10 = arith.constant 0 : index
    %c0_11 = arith.constant 0 : index
    %21 = vector.load %arg3[%c0_9, %c0_10, %c0_11] : memref<1x1x16xf32, #tpu.memory_space<vmem>>, vector<1x1x16xf32>
    tpu.vector_store %arg3[%c0_9, %c0_10, %c0_11], %20 {strides = array<i32>} : memref<1x1x16xf32, #tpu.memory_space<vmem>>, vector<1x1x16xf32>,
    %c0_12 = arith.constant 0 : index
    %c0_13 = arith.constant 0 : index
    %c0_14 = arith.constant 0 : index
    %22 = vector.load %arg4[%c0_12, %c0_13, %c0_14] : memref<1x1x15xf32, #tpu.memory_space<vmem>>, vector<1x1x15xf32>
    %23 = vector.shape_cast %17 : vector<1x15xf32> to vector<1x1x15xf32>
    %24 = arith.addf %22, %23 : vector<1x1x15xf32>
    %c0_15 = arith.constant 0 : index
    %c0_16 = arith.constant 0 : index
    %c0_17 = arith.constant 0 : index
    %25 = vector.load %arg4[%c0_15, %c0_16, %c0_17] : memref<1x1x15xf32, #tpu.memory_space<vmem>>, vector<1x1x15xf32>
    tpu.vector_store %arg4[%c0_15, %c0_16, %c0_17], %24 {strides = array<i32>} : memref<1x1x15xf32, #tpu.memory_space<vmem>>, vector<1x1x15xf32>,
    return
  }
  func.func @transform_0(%arg0: i32, %arg1: i32) -> (i32, i32, i32) {
    %c1_i32 = arith.constant 1 : i32
    %0 = arith.muli %arg0, %c1_i32 : i32
    %1 = arith.addi %0, %arg1 : i32
    %c0_i32 = arith.constant 0 : i32
    %c0_i32_0 = arith.constant 0 : i32
    %c0_i32_1 = arith.constant 0 : i32
    return %1, %c0_i32, %c0_i32_0 : i32, i32, i32
  }
  func.func @transform_1(%arg0: i32, %arg1: i32) -> (i32, i32, i32) {
    %c0_i32 = arith.constant 0 : i32
    %c0_i32_0 = arith.constant 0 : i32
    %c0_i32_1 = arith.constant 0 : i32
    return %arg0, %c0_i32, %c0_i32_0 : i32, i32, i32
  }
  func.func @transform_2(%arg0: i32, %arg1: i32) -> (i32, i32, i32) {
    %c0_i32 = arith.constant 0 : i32
    %c0_i32_0 = arith.constant 0 : i32
    %c0_i32_1 = arith.constant 0 : i32
    return %arg0, %c0_i32, %c0_i32_0 : i32, i32, i32
  }
}

</mosaic_0001>

<llo_original>
// kernel: tpu_custom_call.1
$region0: #{tpu_custom_call.1}
  #allocation0 [shape = 'u32[]', space=smem, size = 0x4, offset = 0x4, fixed_abs, tag = 'smem constant byte address 0x4 - core index']
  #allocation1 [shape = 'u32[144,128]{1,0:T(1,128)}', space=vmem, size = 0x12000, scoped, tag = 'internal scratch']
  %s0 = inlined_call_operand.hbm [shape: f32[8,16,16], index: 0, kind: input, shape index: {}]
  %s1 = inlined_call_operand.hbm [shape: f32[2,1,16], index: 1, kind: output, shape index: {0}]
  %s2 = inlined_call_operand.hbm [shape: f32[2,1,15], index: 2, kind: output, shape index: {1}]
  %3 = xla_tuple %s1, %s2
  %s4 = sld [smem:[#allocation0]]
  $region53: #{tpu_custom_call.1} parent=0
    _
  %s6 = ssub.s32 1, %s4
  %s7 = scalar_select 0, %s6, %s4
  $region1: #{tpu_custom_call.1} parent=0
    #allocation2 [shape = 'u8[65536]{0}', space=vmem, size = 0x10000, scoped, tag = 'input window, operand 0']
    #allocation3 [shape = 's32[2]{0}', space=sflag, size = 0x8, scoped, tag = 'scoped memory for tpu_custom_call.1']
    #allocation4 [shape = 's32[2]{0}', space=sflag, size = 0x8, scoped, tag = 'scoped memory for tpu_custom_call.1']
    #allocation5 [shape = 'u8[1024]{0}', space=vmem, size = 0x400, scoped, tag = 'output window, operand 0']
    #allocation6 [shape = 'u8[1024]{0}', space=vmem, size = 0x400, scoped, tag = 'output window, operand 1']
    #allocation7 [shape = 's32[2]{0}', space=sflag, size = 0x8, scoped, tag = 'scoped memory for tpu_custom_call.1']
    %8 = vsyncpa [#allocation3], 0
    %s9 = scalar_lea.sflag [#allocation3], 1
    %10 = vsyncpa %s9, 0
    %11 = vsyncpa [#allocation4], 0
    %s12 = scalar_lea.sflag [#allocation4], 1
    %13 = vsyncpa %s12, 0
    %14 = vsyncpa [#allocation7], 0
    %s15 = scalar_lea.sflag [#allocation7], 1
    %16 = vsyncpa %s15, 0
    loop: start=0, step=1, limit=4
    $region2: #{tpu_custom_call.1} parent=1 // loop_pre_header
      _
    $region3: #{tpu_custom_call.1} parent=1 // loop_header
      %s18 = sphi 0, %s22
      %p19 = scmp.ge.s32.totalorder %s18, 4
      %s25 = sphi 0, %s37
      %s26 = sphi 0, %s33
      %s27 = sphi 0, %s25
      %s28 = sphi 0, %s26
      %s29 = sphi 0, %s27
      %s30 = sphi 0, %s28
      %s42 = sphi 0, %s44
      %s45 = sphi 0, %s42
      %s46 = sphi 0, %s45
      %s62 = sphi 0, %s46
      %s68 = sphi 0, %s70
      %s71 = sphi 0, %s68
      %s72 = sphi 0, %s71
      %s88 = sphi 0, %s72
      %s94 = sphi 0, %s96
      %s97 = sphi 0, %s94
      %s98 = sphi 0, %s97
      %s114 = sphi 0, %s98
    $region4: #{tpu_custom_call.1} parent=1 // loop_header_branch
      %21 = sbr.rel (%p19) target = $region8
    $region5: #{tpu_custom_call.1} parent=1 // loop_body
      %s23 = ssub.s32 %s18, 1
      %s24 = ssub.s32 %s18, 2
      %s31 = sadd.s32 1, %s26
      %p32 = scmp.ge.s32.totalorder %s31, 1
      %s33 = scalar_select %p32, 0, %s31
      %s34 = sadd.s32 1, %s25
      %s35 = scalar_select %p32, %s34, %s25
      %p36 = scmp.ge.s32.totalorder %s35, 2
      %s37 = scalar_select %p36, 0, %s35
      %s38 = sadd.s32 %s25, %s26
      %s39 = sadd.s32 %s37, %s33
      %s40 = ssub.s32 %s38, %s39
      %p41 = scmp.eq.s32.totalorder %s40, 0
      %s43 = sadd.s32 %s42, 1
      %s44 = scalar_select %p41, %s42, %s43
      %p47 = pneg %p41
      %p48 = scmp.eq.s32.totalorder %s18, 1
      %p49 = por %p47, %p48
      %p50 = scmp.ne.s32.totalorder %s42, %s45
      %p51 = scmp.eq.s32.totalorder %s18, 0
      %p52 = por %p50, %p51
      %p53 = scmp.ne.s32.totalorder %s42, %s45
      %p54 = scmp.eq.s32.totalorder %s23, 1
      %p55 = por %p53, %p54
      %p56 = scmp.ne.s32.totalorder %s45, %s46
      %p57 = scmp.eq.s32.totalorder %s23, 0
      %p58 = por %p56, %p57
      %p59 = scmp.ne.s32.totalorder %s45, %s46
      %p60 = scmp.eq.s32.totalorder %s24, 1
      %p61 = por %p59, %p60
      %p63 = scmp.ne.s32.totalorder %s46, %s62
      %p64 = scmp.eq.s32.totalorder %s24, 0
      %p65 = por %p63, %p64
      %s66 = ssub.s32 %s25, %s37
      %p67 = scmp.eq.s32.totalorder %s66, 0
      %s69 = sadd.s32 %s68, 1
      %s70 = scalar_select %p67, %s68, %s69
      %p73 = pneg %p67
      %p74 = scmp.eq.s32.totalorder %s18, 1
      %p75 = por %p73, %p74
      %p76 = scmp.ne.s32.totalorder %s68, %s71
      %p77 = scmp.eq.s32.totalorder %s18, 0
      %p78 = por %p76, %p77
      %p79 = scmp.ne.s32.totalorder %s68, %s71
      %p80 = scmp.eq.s32.totalorder %s23, 1
      %p81 = por %p79, %p80
      %p82 = scmp.ne.s32.totalorder %s71, %s72
      %p83 = scmp.eq.s32.totalorder %s23, 0
      %p84 = por %p82, %p83
      %p85 = scmp.ne.s32.totalorder %s71, %s72
      %p86 = scmp.eq.s32.totalorder %s24, 1
      %p87 = por %p85, %p86
      %p89 = scmp.ne.s32.totalorder %s72, %s88
      %p90 = scmp.eq.s32.totalorder %s24, 0
      %p91 = por %p89, %p90
      %s92 = ssub.s32 %s25, %s37
      %p93 = scmp.eq.s32.totalorder %s92, 0
      %s95 = sadd.s32 %s94, 1
      %s96 = scalar_select %p93, %s94, %s95
      %p99 = pneg %p93
      %p100 = scmp.eq.s32.totalorder %s18, 1
      %p101 = por %p99, %p100
      %p102 = scmp.ne.s32.totalorder %s94, %s97
      %p103 = scmp.eq.s32.totalorder %s18, 0
      %p104 = por %p102, %p103
      %p105 = scmp.ne.s32.totalorder %s94, %s97
      %p106 = scmp.eq.s32.totalorder %s23, 1
      %p107 = por %p105, %p106
      %p108 = scmp.ne.s32.totalorder %s97, %s98
      %p109 = scmp.eq.s32.totalorder %s23, 0
      %p110 = por %p108, %p109
      %p111 = scmp.ne.s32.totalorder %s97, %s98
      %p112 = scmp.eq.s32.totalorder %s24, 1
      %p113 = por %p111, %p112
      %p115 = scmp.ne.s32.totalorder %s98, %s114
      %p116 = scmp.eq.s32.totalorder %s24, 0
      %p117 = por %p115, %p116
      %p118 = scmp.le.s32.totalorder 1, %s18
      %p119 = scmp.lt.s32.totalorder %s18, 3
      %p120 = pnand %p118, %p119
      %p121 = pneg %p120
      // Predicated region
      $region9: #{tpu_custom_call.1} parent=5 // pred_check
        _
      $region10: #{tpu_custom_call.1} parent=5 // pred_check_branch
        %123 = sbr.rel (%p120) target = $region12
      $region11: #{tpu_custom_call.1} parent=5 // pred_region
        %s124 = ssub.s32 %s18, 1
      $region12: #{tpu_custom_call.1} parent=5 // pred_fallthru
        _
      %p125 = scmp.lt.s32.totalorder %s18, 2
      // Predicated region
      $region13: #{tpu_custom_call.1} parent=5 // pred_check
        %p126 = pneg %p125
      $region14: #{tpu_custom_call.1} parent=5 // pred_check_branch
        %128 = sbr.rel (%p126) target = $region16
      $region15: #{tpu_custom_call.1} parent=5 // pred_region
        // Predicated region
        $region17: #{tpu_custom_call.1} parent=15 // pred_check
          %p129 = pneg %p52
        $region18: #{tpu_custom_call.1} parent=15 // pred_check_branch
          %131 = sbr.rel (%p129) target = $region20
        $region19: #{tpu_custom_call.1} parent=15 // pred_region
          %s132 = sand.u32 %s42, 1
          %s133 = scalar_lea.sflag [#allocation3], %s132
          %s134 = sand.u32 %s42, 1
          %s135 = smul.addr %s134, 64
          %s136 = scalar_lea.vmem [#allocation2], %s135
          %s137 = sadd.s32 %s25, %s26
          %s138 = smul.u32 4, %s137
          %s140 = ssub.s32 1024, 1024
          %141 = vsyncadd %s133, %s140
          %s142 = smul.addr %s138, 2
          %s143 = smul.addr %s142, 128
          %s144 = scalar_lea.hbm %s0, %s143
          %s145 = sshll.u32 %s136, 4
          %s146 = int_to_ptr.vmem [resolvable:$true] %s145
          %151 = dma.hbm_to_vmem [thread:$0]  %s144, 1024, %s146, %s133, 128, 128, 8
        $region20: #{tpu_custom_call.1} parent=15 // pred_fallthru
          _
      $region16: #{tpu_custom_call.1} parent=5 // pred_fallthru
        _
      %p152 = scmp.le.s32.totalorder 1, %s18
      %p153 = scmp.lt.s32.totalorder %s18, 3
      %p154 = pnand %p152, %p153
      %p155 = pneg %p154
      // Predicated region
      $region21: #{tpu_custom_call.1} parent=5 // pred_check
        _
      $region22: #{tpu_custom_call.1} parent=5 // pred_check_branch
        %157 = sbr.rel (%p154) target = $region24
      $region23: #{tpu_custom_call.1} parent=5 // pred_region
        %s158 = ssub.s32 %s18, 1
        %s159 = sand.u32 %s45, 1
        %s160 = scalar_lea.sflag [#allocation3], %s159
        %s161 = sand.u32 %s45, 1
        %s162 = smul.addr %s161, 64
        %s163 = scalar_lea.vmem [#allocation2], %s162
        // Predicated region
        $region25: #{tpu_custom_call.1} parent=23 // pred_check
          %p164 = pneg %p58
        $region26: #{tpu_custom_call.1} parent=23 // pred_check_branch
          %166 = sbr.rel (%p164) target = $region28
        $region27: #{tpu_custom_call.1} parent=23 // pred_region
          %167 = dma.done %s160, 1024
        $region28: #{tpu_custom_call.1} parent=23 // pred_fallthru
          _
        %s168 = sand.u32 %s45, 1
        %s169 = scalar_lea.sflag [#allocation3], %s168
        %s170 = sand.u32 %s45, 1
        %s171 = smul.addr %s170, 64
        %s172 = scalar_lea.vmem [#allocation2], %s171
        %p173 = pneg %p58
        %p174 = pneg %p55
        %p175 = pneg %p84
        %p176 = pneg %p81
        %s177 = sand.u32 %s71, 1
        %s178 = scalar_lea.sflag [#allocation4], %s177
        %s179 = sand.u32 %s71, 1
        %s180 = scalar_lea.vmem [#allocation5], %s179
        %p181 = pneg %p110
        %p182 = pneg %p107
        %s183 = sand.u32 %s97, 1
        %s184 = scalar_lea.sflag [#allocation7], %s183
        %s185 = sand.u32 %s97, 1
        %s186 = scalar_lea.vmem [#allocation6], %s185
        %s187 = sadd.s32 %s27, %s28
        %s188 = smul.u32 4, %s187
        %p189 = scmp.eq.s32.totalorder %s28, 0
        // Predicated region
        $region29: #{tpu_custom_call.1} parent=23 // pred_check
          %p190 = pneg %p189
        $region30: #{tpu_custom_call.1} parent=23 // pred_check_branch
          %192 = sbr.rel (%p190) target = $region32
        $region31: #{tpu_custom_call.1} parent=23 // pred_region
          %vm193 = vcmask 122880
          %194 = vst.msk [vmem:[%s180] sm:$0x1] %vm193, 0.0
          %vm195 = vcmask 114688
          %196 = vst.msk [vmem:[%s186] sm:$0x1] %vm195, 0.0
        $region32: #{tpu_custom_call.1} parent=23 // pred_fallthru
          _
        %v197 = vld [vmem:[%s163] sm:$0xff]
        %v198 = vld [vmem:[%s163 + $0x8] sm:$0xff]
        %v199 = vld [vmem:[%s163 + $0x10] sm:$0xff]
        %v200 = vld [vmem:[%s163 + $0x18] sm:$0xff]
        %v201 = vld [vmem:[%s163 + $0x20] sm:$0xff]
        %v202 = vld [vmem:[%s163 + $0x28] sm:$0xff]
        %v203 = vld [vmem:[%s163 + $0x30] sm:$0xff]
        %v204 = vld [vmem:[%s163 + $0x38] sm:$0xff]
        %vm213 = vcmask 1040384
        %v214 = vrot.slane %v197, 7
        %v215 = vrot.slane %v198, 7
        %v216 = vsel %vm213, %v214, %v215
        %v217 = vrot.slane %v199, 7
        %v218 = vrot.slane %v200, 7
        %v219 = vsel %vm213, %v217, %v218
        %v220 = vrot.slane %v201, 7
        %v221 = vrot.slane %v202, 7
        %v222 = vsel %vm213, %v220, %v221
        %v223 = vrot.slane %v203, 7
        %v224 = vrot.slane %v204, 7
        %v225 = vsel %vm213, %v223, %v224
        %v234 = vsub.f32 %v197, %v214
        %v235 = vsub.f32 %v198, %v216
        %v236 = vsub.f32 %v199, %v217
        %v237 = vsub.f32 %v200, %v219
        %v238 = vsub.f32 %v201, %v220
        %v239 = vsub.f32 %v202, %v222
        %v240 = vsub.f32 %v203, %v223
        %v241 = vsub.f32 %v204, %v225
        %242 = vrot.lane.b32.xlu0 %v197, 1
        %v243 = vpop.permute.xlu0 %242
        %244 = vrot.lane.b32.xlu0 %v198, 1
        %v245 = vpop.permute.xlu0 %244
        %246 = vrot.lane.b32.xlu0 %v199, 1
        %v247 = vpop.permute.xlu0 %246
        %248 = vrot.lane.b32.xlu0 %v200, 1
        %v249 = vpop.permute.xlu0 %248
        %250 = vrot.lane.b32.xlu0 %v201, 1
        %v251 = vpop.permute.xlu0 %250
        %252 = vrot.lane.b32.xlu0 %v202, 1
        %v253 = vpop.permute.xlu0 %252
        %254 = vrot.lane.b32.xlu0 %v203, 1
        %v255 = vpop.permute.xlu0 %254
        %256 = vrot.lane.b32.xlu0 %v204, 1
        %v257 = vpop.permute.xlu0 %256
        %v266 = vsub.f32 %v197, %v243
        %v267 = vsub.f32 %v198, %v245
        %v268 = vsub.f32 %v199, %v247
        %v269 = vsub.f32 %v200, %v249
        %v270 = vsub.f32 %v201, %v251
        %v271 = vsub.f32 %v202, %v253
        %v272 = vsub.f32 %v203, %v255
        %v273 = vsub.f32 %v204, %v257
        %v274 = vmul.f32 %v234, %v234
        %v275 = vmul.f32 %v235, %v235
        %v276 = vmul.f32 %v236, %v236
        %v277 = vmul.f32 %v237, %v237
        %v278 = vmul.f32 %v238, %v238
        %v279 = vmul.f32 %v239, %v239
        %v280 = vmul.f32 %v240, %v240
        %v281 = vmul.f32 %v241, %v241
        %vm282 = vcmask 130049
        %v283 = vsel %vm282, %v274, 0.0
        %v284 = vsel %vm282, %v276, 0.0
        %v285 = vadd.f32 %v283, %v284
        %v286 = vsel %vm282, %v278, 0.0
        %v287 = vadd.f32 %v285, %v286
        %v288 = vsel %vm282, %v280, 0.0
        %v289 = vadd.f32 %v287, %v288
        %vm290 = vcmask 130048
        %v291 = vsel %vm290, %v275, 0.0
        %v292 = vsel %vm290, %v277, 0.0
        %v293 = vadd.f32 %v291, %v292
        %v294 = vsel %vm290, %v279, 0.0
        %v295 = vadd.f32 %v293, %v294
        %v296 = vsel %vm290, %v281, 0.0
        %v297 = vadd.f32 %v295, %v296
        %vm300 = vcmask 1046528
        %v301 = vrot.slane %v289, 1
        %v302 = vrot.slane %v297, 1
        %v303 = vsel %vm300, %v301, %v302
        %v306 = vsel %vm290, %v303, 0.0
        %vm307 = vcmask 129024
        %v308 = vsel %vm307, %v302, 0.0
        %v309 = vadd.f32 %v306, %v308
        %v310 = vrot.slane %v309, 4
        %v311 = vadd.f32 %v309, %v310
        %v312 = vrot.slane %v311, 2
        %v313 = vadd.f32 %v311, %v312
        %v314 = vrot.slane %v313, 1
        %v315 = vadd.f32 %v313, %v314
        %v316 = vmul.f32 %v266, %v266
        %v317 = vmul.f32 %v267, %v267
        %v318 = vmul.f32 %v268, %v268
        %v319 = vmul.f32 %v269, %v269
        %v320 = vmul.f32 %v270, %v270
        %v321 = vmul.f32 %v271, %v271
        %v322 = vmul.f32 %v272, %v272
        %v323 = vmul.f32 %v273, %v273
        %vm324 = vcmask 130056
        %v325 = vsel %vm324, %v316, 0.0
        %v326 = vsel %vm324, %v318, 0.0
        %v327 = vadd.f32 %v325, %v326
        %v328 = vsel %vm324, %v320, 0.0
        %v329 = vadd.f32 %v327, %v328
        %v330 = vsel %vm324, %v322, 0.0
        %v331 = vadd.f32 %v329, %v330
        %v332 = vsel %vm324, %v317, 0.0
        %v333 = vsel %vm324, %v319, 0.0
        %v334 = vadd.f32 %v332, %v333
        %v335 = vsel %vm324, %v321, 0.0
        %v336 = vadd.f32 %v334, %v335
        %v337 = vsel %vm324, %v323, 0.0
        %v338 = vadd.f32 %v336, %v337
        %v339 = vsel %vm324, %v331, 0.0
        %v340 = vsel %vm324, %v338, 0.0
        %v341 = vadd.f32 %v339, %v340
        %v342 = vrot.slane %v341, 4
        %v343 = vadd.f32 %v341, %v342
        %v344 = vrot.slane %v343, 2
        %v345 = vadd.f32 %v343, %v344
        %v346 = vrot.slane %v345, 1
        %v347 = vadd.f32 %v345, %v346
        %v348 = vld [vmem:[%s180] sm:$0x1]
        %v349 = vadd.f32 %v348, %v315
        %vm350 = vcmask 122880
        %351 = vst.msk [vmem:[%s180] sm:$0x1] %vm350, %v349
        %v352 = vld [vmem:[%s186] sm:$0x1]
        %v355 = vunpack.c.l.s4 1966171168
        %v356 = vunpack.c.0.s8 %v355
        %v357 = vlaneseq
        %v358 = vshrl.u32 %v357, 7
        %v359 = vsub.s32 %v356, %v358
        %v360 = vrot.slane %v347, %v359
        %v362 = vunpack.c.l.s4 1966171168
        %v363 = vunpack.c.0.s8 %v362
        %v364 = vlaneseq
        %v365 = vshrl.u32 %v364, 7
        %v366 = vsub.s32 %v363, %v365
        %v367 = vrot.slane %v360, %v366
        %368 = vrot.lane.b32.xlu0 %v367, 127
        %v369 = vpop.permute.xlu0 %368
        %v371 = vadd.f32 %v352, %v369
        %vm372 = vcmask 114688
        %373 = vst.msk [vmem:[%s186] sm:$0x1] %vm372, %v371
        %s374 = sand.u32 %s71, 1
        %s375 = scalar_lea.sflag [#allocation4], %s374
        %s376 = sand.u32 %s71, 1
        %s377 = scalar_lea.vmem [#allocation5], %s376
        %s378 = sand.u32 %s97, 1
        %s379 = scalar_lea.sflag [#allocation7], %s378
        %s380 = sand.u32 %s97, 1
        %s381 = scalar_lea.vmem [#allocation6], %s380
        // Predicated region
        $region33: #{tpu_custom_call.1} parent=23 // pred_check
          %p382 = pneg %p81
        $region34: #{tpu_custom_call.1} parent=23 // pred_check_branch
          %384 = sbr.rel (%p382) target = $region36
        $region35: #{tpu_custom_call.1} parent=23 // pred_region
          %s386 = ssub.s32 16, 16
          %387 = vsyncadd %s375, %s386
          %s388 = smul.addr %s27, 16
          %s389 = scalar_lea.hbm %s1, %s388
          %s391 = sshll.u32 %s377, 4
          %s392 = int_to_ptr.vmem [resolvable:$true] %s391
          %394 = dma.vmem_to_hbm [thread:$0]  %s392, 16, %s389, %s375
        $region36: #{tpu_custom_call.1} parent=23 // pred_fallthru
          _
        // Predicated region
        $region37: #{tpu_custom_call.1} parent=23 // pred_check
          %p395 = pneg %p107
        $region38: #{tpu_custom_call.1} parent=23 // pred_check_branch
          %397 = sbr.rel (%p395) target = $region40
        $region39: #{tpu_custom_call.1} parent=23 // pred_region
          %s399 = ssub.s32 16, 16
          %400 = vsyncadd %s379, %s399
          %s401 = smul.addr %s27, 16
          %s402 = scalar_lea.hbm %s2, %s401
          %s404 = sshll.u32 %s381, 4
          %s405 = int_to_ptr.vmem [resolvable:$true] %s404
          %407 = dma.vmem_to_hbm [thread:$0]  %s405, 16, %s402, %s379
        $region40: #{tpu_custom_call.1} parent=23 // pred_fallthru
          _
      $region24: #{tpu_custom_call.1} parent=5 // pred_fallthru
        _
      %p408 = scmp.le.s32.totalorder 2, %s18
      // Predicated region
      $region41: #{tpu_custom_call.1} parent=5 // pred_check
        %p409 = pneg %p408
      $region42: #{tpu_custom_call.1} parent=5 // pred_check_branch
        %411 = sbr.rel (%p409) target = $region44
      $region43: #{tpu_custom_call.1} parent=5 // pred_region
        %s412 = ssub.s32 %s18, 2
        // Predicated region
        $region45: #{tpu_custom_call.1} parent=43 // pred_check
          %p413 = pneg %p87
        $region46: #{tpu_custom_call.1} parent=43 // pred_check_branch
          %415 = sbr.rel (%p413) target = $region48
        $region47: #{tpu_custom_call.1} parent=43 // pred_region
          %s416 = sand.u32 %s72, 1
          %s417 = scalar_lea.sflag [#allocation4], %s416
          %s418 = sand.u32 %s72, 1
          %s419 = scalar_lea.vmem [#allocation5], %s418
          %420 = dma.done %s417, 16
        $region48: #{tpu_custom_call.1} parent=43 // pred_fallthru
          _
        // Predicated region
        $region49: #{tpu_custom_call.1} parent=43 // pred_check
          %p421 = pneg %p113
        $region50: #{tpu_custom_call.1} parent=43 // pred_check_branch
          %423 = sbr.rel (%p421) target = $region52
        $region51: #{tpu_custom_call.1} parent=43 // pred_region
          %s424 = sand.u32 %s98, 1
          %s425 = scalar_lea.sflag [#allocation7], %s424
          %s426 = sand.u32 %s98, 1
          %s427 = scalar_lea.vmem [#allocation6], %s426
          %428 = dma.done %s425, 16
        $region52: #{tpu_custom_call.1} parent=43 // pred_fallthru
          _
      $region44: #{tpu_custom_call.1} parent=5 // pred_fallthru
        _
    $region6: #{tpu_custom_call.1} parent=1 // loop_footer
      %s22 = sadd.s32 1, %s18
    $region7: #{tpu_custom_call.1} parent=1 // loop_footer_branch
      %17 = sbr.rel target = $region3
    $region8: #{tpu_custom_call.1} parent=1 // loop_exit
      _
    %429 = vsyncpa [#allocation3], 1
    %s430 = scalar_lea.sflag [#allocation3], 1
    %431 = vsyncpa %s430, 1
    %432 = vsyncpa [#allocation4], 1
    %s433 = scalar_lea.sflag [#allocation4], 1
    %434 = vsyncpa %s433, 1
    %435 = vsyncpa [#allocation7], 1
    %s436 = scalar_lea.sflag [#allocation7], 1
    %437 = vsyncpa %s436, 1

</llo_original>
